<compile_context>
chip_gen: v7x
topology: tpu7x:2x2x1
jax: 0.10.0
libtpu: 0.0.40
codegen_flags: <defaults>
</compile_context>

<pallas_src>
import jax
import jax.numpy as jnp
import numpy as np
from jax.experimental import pallas as pl
from jax.experimental.pallas import tpu as pltpu


def _ocp_kernel(xt_ref, ut_ref, lt_ref, x0t_ref, u0t_ref, gmmt_ref,
                a_ref, b_ref, q_ref, r_ref, qf_ref, xref_ref, out_ref):
    """Whole OCP Lagrangian in one shot, lane-major.

    xt_ref  : (dimx, (N+1)*B) VMEM  columns are x_i[b], col = i*B + b
    ut_ref  : (dimu,  N*B)    VMEM  columns are u_i[b]
    lt_ref  : (dimx, (N+1)*B) VMEM  columns are lmd_i[b]
    x0t_ref : (dimx, B)       VMEM
    u0t_ref : (dimu, B)       VMEM  (zeros for the V-function path)
    gmmt_ref: (dimu, B)       VMEM  (zeros for the V-function path)
    a/b/q/r/qf_ref            SMEM  dynamics / cost matrices (scalars)
    xref_ref: (dimx,)         SMEM
    out_ref : (1, B)          VMEM
    """
    dimx = xt_ref.shape[0]
    dimu = ut_ref.shape[0]
    Bsz = x0t_ref.shape[1]
    R = ut_ref.shape[1]          # N * B
    N = R // Bsz

    xt = xt_ref[...]             # (dimx, (N+1)*B)
    ut = ut_ref[...]             # (dimu, R)
    lt = lt_ref[...]             # (dimx, (N+1)*B)

    # Lane-dense per-stage rows (each (1, R)); all stages processed in parallel.
    xc = [xt[d:d + 1, 0:R] for d in range(dimx)]            # x_i
    xn = [xt[d:d + 1, Bsz:R + Bsz] for d in range(dimx)]    # x_{i+1}
    ln = [lt[d:d + 1, Bsz:R + Bsz] for d in range(dimx)]    # lmd_{i+1}
    uc = [ut[d:d + 1, 0:R] for d in range(dimu)]            # u_i
    dx = [xc[d] - xref_ref[d] for d in range(dimx)]         # x_i - xref

    per = jnp.zeros((1, R), jnp.float32)

    # Dynamics residual term: lmd_{i+1} · (A x_i + B u_i - x_{i+1})
    # (unrolled VPU broadcast-FMAs, scalar coefficients from SMEM -> no MXU).
    for d in range(dimx):
        fd = -xn[d]
        for k in range(dimx):
            fd = fd + a_ref[d, k] * xc[k]
        for k in range(dimu):
            fd = fd + b_ref[d, k] * uc[k]
        per = per + ln[d] * fd

    # Stage cost: 0.5 * (dx^T Q dx + u^T R u), all stages at once.
    for d in range(dimx):
        qd = q_ref[d, 0] * dx[0]
        for k in range(1, dimx):
            qd = qd + q_ref[d, k] * dx[k]
        per = per + 0.5 * dx[d] * qd
    for d in range(dimu):
        rd = r_ref[d, 0] * uc[0]
        for k in range(1, dimu):
            rd = rd + r_ref[d, k] * uc[k]
        per = per + 0.5 * uc[d] * rd

    # Stage -> batch reduction: out[0, b] = sum_i per[0, i*B + b]
    # (N unrolled lane-slice adds; no sel constant, no reshape, no MXU).
    acc = per[:, 0:Bsz]
    for i in range(1, N):
        acc = acc + per[:, i * Bsz:(i + 1) * Bsz]

    # O(1) terms, all (1, B): terminal cost + lmd0·(x[0]-x0) + gmm·(u[0]-u0).
    xN = [xt[d:d + 1, R:R + Bsz] for d in range(dimx)]
    x1 = [xt[d:d + 1, 0:Bsz] for d in range(dimx)]
    l0 = [lt[d:d + 1, 0:Bsz] for d in range(dimx)]
    dxN = [xN[d] - xref_ref[d] for d in range(dimx)]
    for d in range(dimx):
        qd = qf_ref[d, 0] * dxN[0]
        for k in range(1, dimx):
            qd = qd + qf_ref[d, k] * dxN[k]
        acc = acc + 0.5 * dxN[d] * qd
        acc = acc + l0[d] * (x1[d] - x0t_ref[d:d + 1, :])
    for d in range(dimu):
        acc = acc + gmmt_ref[d:d + 1, :] * (ut[d:d + 1, 0:Bsz]
                                            - u0t_ref[d:d + 1, :])

    out_ref[...] = acc


@jax.jit
def _ocp_forward_impl(x0, x, u, lmd, A, Bm, Q, Rm, Qf, xref, u0, gmm):
    f32 = jnp.float32
    Np1, Bsz, dimx = x.shape
    N = Np1 - 1
    dimu = u.shape[-1]
    R = N * Bsz

    # Transpose to lane-major layout (tiny copies, fused under this jit).
    xt = jnp.transpose(jnp.asarray(x, f32), (2, 0, 1)).reshape(dimx, Np1 * Bsz)
    lt = jnp.transpose(jnp.asarray(lmd, f32), (2, 0, 1)).reshape(dimx, Np1 * Bsz)
    ut = jnp.transpose(jnp.asarray(u, f32), (2, 0, 1)).reshape(dimu, R)
    x0t = jnp.asarray(x0, f32).T
    u0t = jnp.asarray(u0, f32).T
    gmmt = jnp.asarray(gmm, f32).T

    vmem = lambda: pl.BlockSpec(memory_space=pltpu.MemorySpace.VMEM)
    smem = lambda: pl.BlockSpec(memory_space=pltpu.MemorySpace.SMEM)

    out = pl.pallas_call(
        _ocp_kernel,
        out_shape=jax.ShapeDtypeStruct((1, Bsz), f32),
        in_specs=[vmem() for _ in range(6)] + [smem() for _ in range(6)],
        out_specs=vmem(),
    )(xt, ut, lt, x0t, u0t, gmmt,
      jnp.asarray(A, f32), jnp.asarray(Bm, f32), jnp.asarray(Q, f32),
      jnp.asarray(Rm, f32), jnp.asarray(Qf, f32),
      jnp.asarray(xref, f32).reshape(dimx))
    return out[0]


def ocp_forward(x0, x, u, lmd, params, u0=None, gmm=None):
    """Pallas implementation of OCP.forward.

    Returns V_fn (B,) if u0 is None, else Q_fn (B,).
    Layout (same as the PyTorch module, stage-major):
      x0 (B, dimx), x (N+1, B, dimx), u (N, B, dimu), lmd (N+1, B, dimx).
    """
    assert x.ndim == 3 and u.ndim == 3 and lmd.ndim == 3 and x0.ndim == 2
    A, Bm, Q, R, Qf, xref = (params[k] for k in ("A", "B", "Q", "R", "Qf", "xref"))
    Bsz = x.shape[1]
    dimu = u.shape[-1]
    if u0 is None:
        u0 = jnp.zeros((Bsz, dimu), jnp.float32)
        gmm = jnp.zeros((Bsz, dimu), jnp.float32)
    else:
        assert gmm is not None and u0.ndim == 2 and gmm.ndim == 2
    return _ocp_forward_impl(x0, x, u, lmd, A, Bm, Q, R, Qf, xref, u0, gmm)


def ocp_forward_ref(x0, x, u, lmd, params, u0=None, gmm=None):
    """Pure-JAX reference mirroring OCP.forward semantics (exact f32)."""
    A, Bm, Q, R, Qf, xref = (params[k] for k in ("A", "B", "Q", "R", "Qf", "xref"))
    hp = jax.lax.Precision.HIGHEST
    N = u.shape[0]
    V = jnp.zeros(x.shape[1], jnp.float32)
    for i in range(N):
        dx = x[i] - xref
        V = V + 0.5 * (jnp.sum(jnp.dot(dx, Q, precision=hp) * dx, -1)
                       + jnp.sum(jnp.dot(u[i], R, precision=hp) * u[i], -1))
        xres = (jnp.dot(x[i], A.T, precision=hp)
                + jnp.dot(u[i], Bm.T, precision=hp) - x[i + 1])
        V = V + jnp.sum(lmd[i + 1] * xres, -1)
    dxN = x[N] - xref
    V = V + 0.5 * jnp.sum(jnp.dot(dxN, Qf, precision=hp) * dxN, -1)
    V = V + jnp.sum(lmd[0] * (x[0] - x0), -1)
    if u0 is not None:
        V = V + jnp.sum(gmm * (u[0] - u0), -1)
    return V


if __name__ == "__main__":
    dimx, dimu, N, B = 4, 2, 8, 2

    key = jax.random.PRNGKey(0)
    ks = jax.random.split(key, 12)

    # Deterministic synthetic parameters (symmetric PSD cost Hessians).
    A = jnp.eye(dimx, dtype=jnp.float32) + 0.1 * jax.random.normal(ks[0], (dimx, dimx))
    Bm = 0.1 * jax.random.normal(ks[1], (dimx, dimu))
    Mq = jax.random.normal(ks[2], (dimx, dimx))
    Q = Mq @ Mq.T / dimx + 0.1 * jnp.eye(dimx)
    Mr = jax.random.normal(ks[3], (dimu, dimu))
    R = Mr @ Mr.T / dimu + 0.1 * jnp.eye(dimu)
    Mf = jax.random.normal(ks[4], (dimx, dimx))
    Qf = Mf @ Mf.T / dimx + 0.1 * jnp.eye(dimx)
    xref = 0.5 * jax.random.normal(ks[5], (dimx,))
    params = dict(A=A, B=Bm, Q=Q, R=R, Qf=Qf, xref=xref)

    # Inputs (stage-major, batched).
    x0 = jax.random.normal(ks[6], (B, dimx), jnp.float32)
    x = jax.random.normal(ks[7], (N + 1, B, dimx), jnp.float32)
    u = jax.random.normal(ks[8], (N, B, dimu), jnp.float32)
    lmd = jax.random.normal(ks[9], (N + 1, B, dimx), jnp.float32)
    u0 = jax.random.normal(ks[10], (B, dimu), jnp.float32)
    gmm = jax.random.normal(ks[11], (B, dimu), jnp.float32)

    # V-function path (u0 is None)
    v_kernel = jax.block_until_ready(ocp_forward(x0, x, u, lmd, params))
    v_ref = jax.block_until_ready(ocp_forward_ref(x0, x, u, lmd, params))
    np.testing.assert_allclose(np.asarray(v_kernel), np.asarray(v_ref),
                               rtol=1e-5, atol=1e-5)

    # Q-function path (u0, gmm provided)
    q_kernel = jax.block_until_ready(ocp_forward(x0, x, u, lmd, params, u0, gmm))
    q_ref = jax.block_until_ready(ocp_forward_ref(x0, x, u, lmd, params, u0, gmm))
    np.testing.assert_allclose(np.asarray(q_kernel), np.asarray(q_ref),
                               rtol=1e-5, atol=1e-5)

    print("KERNEL_OK")
</pallas_src>

<mosaic_0001>
module attributes {stable_mosaic.version = 11 : i64} {
  func.func @_ocp_kernel(%arg0: memref<4x18xf32, #tpu.memory_space<vmem>>, %arg1: memref<2x16xf32, #tpu.memory_space<vmem>>, %arg2: memref<4x18xf32, #tpu.memory_space<vmem>>, %arg3: memref<4x2xf32, #tpu.memory_space<vmem>>, %arg4: memref<2x2xf32, #tpu.memory_space<vmem>>, %arg5: memref<2x2xf32, #tpu.memory_space<vmem>>, %arg6: memref<4x4xf32, #tpu.memory_space<smem>>, %arg7: memref<4x2xf32, #tpu.memory_space<smem>>, %arg8: memref<4x4xf32, #tpu.memory_space<smem>>, %arg9: memref<2x2xf32, #tpu.memory_space<smem>>, %arg10: memref<4x4xf32, #tpu.memory_space<smem>>, %arg11: memref<4xf32, #tpu.memory_space<smem>>, %arg12: memref<1x2xf32, #tpu.memory_space<vmem>>) attributes {dimension_semantics = [], scalar_prefetch = 0 : i64, scratch_operands = 0 : i64, tpu.core_type = #tpu.core_type<tc>} {
    %c0 = arith.constant 0 : index
    %c0_0 = arith.constant 0 : index
    %0 = vector.load %arg0[%c0, %c0_0] : memref<4x18xf32, #tpu.memory_space<vmem>>, vector<4x18xf32>
    %c0_1 = arith.constant 0 : index
    %c0_2 = arith.constant 0 : index
    %1 = vector.load %arg1[%c0_1, %c0_2] : memref<2x16xf32, #tpu.memory_space<vmem>>, vector<2x16xf32>
    %c0_3 = arith.constant 0 : index
    %c0_4 = arith.constant 0 : index
    %2 = vector.load %arg2[%c0_3, %c0_4] : memref<4x18xf32, #tpu.memory_space<vmem>>, vector<4x18xf32>
    %3 = vector.extract_strided_slice %0 {offsets = [0, 0], sizes = [1, 16], strides = [1, 1]} : vector<4x18xf32> to vector<1x16xf32>
    %4 = vector.extract_strided_slice %0 {offsets = [1, 0], sizes = [1, 16], strides = [1, 1]} : vector<4x18xf32> to vector<1x16xf32>
    %5 = vector.extract_strided_slice %0 {offsets = [2, 0], sizes = [1, 16], strides = [1, 1]} : vector<4x18xf32> to vector<1x16xf32>
    %6 = vector.extract_strided_slice %0 {offsets = [3, 0], sizes = [1, 16], strides = [1, 1]} : vector<4x18xf32> to vector<1x16xf32>
    %7 = vector.extract_strided_slice %0 {offsets = [0, 2], sizes = [1, 16], strides = [1, 1]} : vector<4x18xf32> to vector<1x16xf32>
    %8 = vector.extract_strided_slice %0 {offsets = [1, 2], sizes = [1, 16], strides = [1, 1]} : vector<4x18xf32> to vector<1x16xf32>
    %9 = vector.extract_strided_slice %0 {offsets = [2, 2], sizes = [1, 16], strides = [1, 1]} : vector<4x18xf32> to vector<1x16xf32>
    %10 = vector.extract_strided_slice %0 {offsets = [3, 2], sizes = [1, 16], strides = [1, 1]} : vector<4x18xf32> to vector<1x16xf32>
    %11 = vector.extract_strided_slice %2 {offsets = [0, 2], sizes = [1, 16], strides = [1, 1]} : vector<4x18xf32> to vector<1x16xf32>
    %12 = vector.extract_strided_slice %2 {offsets = [1, 2], sizes = [1, 16], strides = [1, 1]} : vector<4x18xf32> to vector<1x16xf32>
    %13 = vector.extract_strided_slice %2 {offsets = [2, 2], sizes = [1, 16], strides = [1, 1]} : vector<4x18xf32> to vector<1x16xf32>
    %14 = vector.extract_strided_slice %2 {offsets = [3, 2], sizes = [1, 16], strides = [1, 1]} : vector<4x18xf32> to vector<1x16xf32>
    %15 = vector.extract_strided_slice %1 {offsets = [0, 0], sizes = [1, 16], strides = [1, 1]} : vector<2x16xf32> to vector<1x16xf32>
    %16 = vector.extract_strided_slice %1 {offsets = [1, 0], sizes = [1, 16], strides = [1, 1]} : vector<2x16xf32> to vector<1x16xf32>
    %c0_5 = arith.constant 0 : index
    %17 = memref.load %arg11[%c0_5] : memref<4xf32, #tpu.memory_space<smem>>
    %18 = vector.broadcast %17 : f32 to vector<1x16xf32>
    %19 = arith.subf %3, %18 : vector<1x16xf32>
    %c1 = arith.constant 1 : index
    %20 = memref.load %arg11[%c1] : memref<4xf32, #tpu.memory_space<smem>>
    %21 = vector.broadcast %20 : f32 to vector<1x16xf32>
    %22 = arith.subf %4, %21 : vector<1x16xf32>
    %c2 = arith.constant 2 : index
    %23 = memref.load %arg11[%c2] : memref<4xf32, #tpu.memory_space<smem>>
    %24 = vector.broadcast %23 : f32 to vector<1x16xf32>
    %25 = arith.subf %5, %24 : vector<1x16xf32>
    %c3 = arith.constant 3 : index
    %26 = memref.load %arg11[%c3] : memref<4xf32, #tpu.memory_space<smem>>
    %27 = vector.broadcast %26 : f32 to vector<1x16xf32>
    %28 = arith.subf %6, %27 : vector<1x16xf32>
    %cst = arith.constant 0.000000e+00 : f32
    %29 = vector.broadcast %cst : f32 to vector<1x16xf32>
    %cst_6 = arith.constant 0.000000e+00 : f32
    %30 = vector.broadcast %cst_6 : f32 to vector<1x16xf32>
    %31 = arith.subf %30, %7 : vector<1x16xf32>
    %c0_7 = arith.constant 0 : index
    %c0_8 = arith.constant 0 : index
    %32 = memref.load %arg6[%c0_7, %c0_8] : memref<4x4xf32, #tpu.memory_space<smem>>
    %33 = vector.broadcast %32 : f32 to vector<1x16xf32>
    %34 = arith.mulf %33, %3 : vector<1x16xf32>
    %35 = arith.addf %31, %34 : vector<1x16xf32>
    %c0_9 = arith.constant 0 : index
    %c1_10 = arith.constant 1 : index
    %36 = memref.load %arg6[%c0_9, %c1_10] : memref<4x4xf32, #tpu.memory_space<smem>>
    %37 = vector.broadcast %36 : f32 to vector<1x16xf32>
    %38 = arith.mulf %37, %4 : vector<1x16xf32>
    %39 = arith.addf %35, %38 : vector<1x16xf32>
    %c0_11 = arith.constant 0 : index
    %c2_12 = arith.constant 2 : index
    %40 = memref.load %arg6[%c0_11, %c2_12] : memref<4x4xf32, #tpu.memory_space<smem>>
    %41 = vector.broadcast %40 : f32 to vector<1x16xf32>
    %42 = arith.mulf %41, %5 : vector<1x16xf32>
    %43 = arith.addf %39, %42 : vector<1x16xf32>
    %c0_13 = arith.constant 0 : index
    %c3_14 = arith.constant 3 : index
    %44 = memref.load %arg6[%c0_13, %c3_14] : memref<4x4xf32, #tpu.memory_space<smem>>
    %45 = vector.broadcast %44 : f32 to vector<1x16xf32>
    %46 = arith.mulf %45, %6 : vector<1x16xf32>
    %47 = arith.addf %43, %46 : vector<1x16xf32>
    %c0_15 = arith.constant 0 : index
    %c0_16 = arith.constant 0 : index
    %48 = memref.load %arg7[%c0_15, %c0_16] : memref<4x2xf32, #tpu.memory_space<smem>>
    %49 = vector.broadcast %48 : f32 to vector<1x16xf32>
    %50 = arith.mulf %49, %15 : vector<1x16xf32>
    %51 = arith.addf %47, %50 : vector<1x16xf32>
    %c0_17 = arith.constant 0 : index
    %c1_18 = arith.constant 1 : index
    %52 = memref.load %arg7[%c0_17, %c1_18] : memref<4x2xf32, #tpu.memory_space<smem>>
    %53 = vector.broadcast %52 : f32 to vector<1x16xf32>
    %54 = arith.mulf %53, %16 : vector<1x16xf32>
    %55 = arith.addf %51, %54 : vector<1x16xf32>
    %56 = arith.mulf %11, %55 : vector<1x16xf32>
    %57 = arith.addf %29, %56 : vector<1x16xf32>
    %cst_19 = arith.constant 0.000000e+00 : f32
    %58 = vector.broadcast %cst_19 : f32 to vector<1x16xf32>
    %59 = arith.subf %58, %8 : vector<1x16xf32>
    %c1_20 = arith.constant 1 : index
    %c0_21 = arith.constant 0 : index
    %60 = memref.load %arg6[%c1_20, %c0_21] : memref<4x4xf32, #tpu.memory_space<smem>>
    %61 = vector.broadcast %60 : f32 to vector<1x16xf32>
    %62 = arith.mulf %61, %3 : vector<1x16xf32>
    %63 = arith.addf %59, %62 : vector<1x16xf32>
    %c1_22 = arith.constant 1 : index
    %c1_23 = arith.constant 1 : index
    %64 = memref.load %arg6[%c1_22, %c1_23] : memref<4x4xf32, #tpu.memory_space<smem>>
    %65 = vector.broadcast %64 : f32 to vector<1x16xf32>
    %66 = arith.mulf %65, %4 : vector<1x16xf32>
    %67 = arith.addf %63, %66 : vector<1x16xf32>
    %c1_24 = arith.constant 1 : index
    %c2_25 = arith.constant 2 : index
    %68 = memref.load %arg6[%c1_24, %c2_25] : memref<4x4xf32, #tpu.memory_space<smem>>
    %69 = vector.broadcast %68 : f32 to vector<1x16xf32>
    %70 = arith.mulf %69, %5 : vector<1x16xf32>
    %71 = arith.addf %67, %70 : vector<1x16xf32>
    %c1_26 = arith.constant 1 : index
    %c3_27 = arith.constant 3 : index
    %72 = memref.load %arg6[%c1_26, %c3_27] : memref<4x4xf32, #tpu.memory_space<smem>>
    %73 = vector.broadcast %72 : f32 to vector<1x16xf32>
    %74 = arith.mulf %73, %6 : vector<1x16xf32>
    %75 = arith.addf %71, %74 : vector<1x16xf32>
    %c1_28 = arith.constant 1 : index
    %c0_29 = arith.constant 0 : index
    %76 = memref.load %arg7[%c1_28, %c0_29] : memref<4x2xf32, #tpu.memory_space<smem>>
    %77 = vector.broadcast %76 : f32 to vector<1x16xf32>
    %78 = arith.mulf %77, %15 : vector<1x16xf32>
    %79 = arith.addf %75, %78 : vector<1x16xf32>
    %c1_30 = arith.constant 1 : index
    %c1_31 = arith.constant 1 : index
    %80 = memref.load %arg7[%c1_30, %c1_31] : memref<4x2xf32, #tpu.memory_space<smem>>
    %81 = vector.broadcast %80 : f32 to vector<1x16xf32>
    %82 = arith.mulf %81, %16 : vector<1x16xf32>
    %83 = arith.addf %79, %82 : vector<1x16xf32>
    %84 = arith.mulf %12, %83 : vector<1x16xf32>
    %85 = arith.addf %57, %84 : vector<1x16xf32>
    %cst_32 = arith.constant 0.000000e+00 : f32
    %86 = vector.broadcast %cst_32 : f32 to vector<1x16xf32>
    %87 = arith.subf %86, %9 : vector<1x16xf32>
    %c2_33 = arith.constant 2 : index
    %c0_34 = arith.constant 0 : index
    %88 = memref.load %arg6[%c2_33, %c0_34] : memref<4x4xf32, #tpu.memory_space<smem>>
    %89 = vector.broadcast %88 : f32 to vector<1x16xf32>
    %90 = arith.mulf %89, %3 : vector<1x16xf32>
    %91 = arith.addf %87, %90 : vector<1x16xf32>
    %c2_35 = arith.constant 2 : index
    %c1_36 = arith.constant 1 : index
    %92 = memref.load %arg6[%c2_35, %c1_36] : memref<4x4xf32, #tpu.memory_space<smem>>
    %93 = vector.broadcast %92 : f32 to vector<1x16xf32>
    %94 = arith.mulf %93, %4 : vector<1x16xf32>
    %95 = arith.addf %91, %94 : vector<1x16xf32>
    %c2_37 = arith.constant 2 : index
    %c2_38 = arith.constant 2 : index
    %96 = memref.load %arg6[%c2_37, %c2_38] : memref<4x4xf32, #tpu.memory_space<smem>>
    %97 = vector.broadcast %96 : f32 to vector<1x16xf32>
    %98 = arith.mulf %97, %5 : vector<1x16xf32>
    %99 = arith.addf %95, %98 : vector<1x16xf32>
    %c2_39 = arith.constant 2 : index
    %c3_40 = arith.constant 3 : index
    %100 = memref.load %arg6[%c2_39, %c3_40] : memref<4x4xf32, #tpu.memory_space<smem>>
    %101 = vector.broadcast %100 : f32 to vector<1x16xf32>
    %102 = arith.mulf %101, %6 : vector<1x16xf32>
    %103 = arith.addf %99, %102 : vector<1x16xf32>
    %c2_41 = arith.constant 2 : index
    %c0_42 = arith.constant 0 : index
    %104 = memref.load %arg7[%c2_41, %c0_42] : memref<4x2xf32, #tpu.memory_space<smem>>
    %105 = vector.broadcast %104 : f32 to vector<1x16xf32>
    %106 = arith.mulf %105, %15 : vector<1x16xf32>
    %107 = arith.addf %103, %106 : vector<1x16xf32>
    %c2_43 = arith.constant 2 : index
    %c1_44 = arith.constant 1 : index
    %108 = memref.load %arg7[%c2_43, %c1_44] : memref<4x2xf32, #tpu.memory_space<smem>>
    %109 = vector.broadcast %108 : f32 to vector<1x16xf32>
    %110 = arith.mulf %109, %16 : vector<1x16xf32>
    %111 = arith.addf %107, %110 : vector<1x16xf32>
    %112 = arith.mulf %13, %111 : vector<1x16xf32>
    %113 = arith.addf %85, %112 : vector<1x16xf32>
    %cst_45 = arith.constant 0.000000e+00 : f32
    %114 = vector.broadcast %cst_45 : f32 to vector<1x16xf32>
    %115 = arith.subf %114, %10 : vector<1x16xf32>
    %c3_46 = arith.constant 3 : index
    %c0_47 = arith.constant 0 : index
    %116 = memref.load %arg6[%c3_46, %c0_47] : memref<4x4xf32, #tpu.memory_space<smem>>
    %117 = vector.broadcast %116 : f32 to vector<1x16xf32>
    %118 = arith.mulf %117, %3 : vector<1x16xf32>
    %119 = arith.addf %115, %118 : vector<1x16xf32>
    %c3_48 = arith.constant 3 : index
    %c1_49 = arith.constant 1 : index
    %120 = memref.load %arg6[%c3_48, %c1_49] : memref<4x4xf32, #tpu.memory_space<smem>>
    %121 = vector.broadcast %120 : f32 to vector<1x16xf32>
    %122 = arith.mulf %121, %4 : vector<1x16xf32>
    %123 = arith.addf %119, %122 : vector<1x16xf32>
    %c3_50 = arith.constant 3 : index
    %c2_51 = arith.constant 2 : index
    %124 = memref.load %arg6[%c3_50, %c2_51] : memref<4x4xf32, #tpu.memory_space<smem>>
    %125 = vector.broadcast %124 : f32 to vector<1x16xf32>
    %126 = arith.mulf %125, %5 : vector<1x16xf32>
    %127 = arith.addf %123, %126 : vector<1x16xf32>
    %c3_52 = arith.constant 3 : index
    %c3_53 = arith.constant 3 : index
    %128 = memref.load %arg6[%c3_52, %c3_53] : memref<4x4xf32, #tpu.memory_space<smem>>
    %129 = vector.broadcast %128 : f32 to vector<1x16xf32>
    %130 = arith.mulf %129, %6 : vector<1x16xf32>
    %131 = arith.addf %127, %130 : vector<1x16xf32>
    %c3_54 = arith.constant 3 : index
    %c0_55 = arith.constant 0 : index
    %132 = memref.load %arg7[%c3_54, %c0_55] : memref<4x2xf32, #tpu.memory_space<smem>>
    %133 = vector.broadcast %132 : f32 to vector<1x16xf32>
    %134 = arith.mulf %133, %15 : vector<1x16xf32>
    %135 = arith.addf %131, %134 : vector<1x16xf32>
    %c3_56 = arith.constant 3 : index
    %c1_57 = arith.constant 1 : index
    %136 = memref.load %arg7[%c3_56, %c1_57] : memref<4x2xf32, #tpu.memory_space<smem>>
    %137 = vector.broadcast %136 : f32 to vector<1x16xf32>
    %138 = arith.mulf %137, %16 : vector<1x16xf32>
    %139 = arith.addf %135, %138 : vector<1x16xf32>
    %140 = arith.mulf %14, %139 : vector<1x16xf32>
    %141 = arith.addf %113, %140 : vector<1x16xf32>
    %c0_58 = arith.constant 0 : index
    %c0_59 = arith.constant 0 : index
    %142 = memref.load %arg8[%c0_58, %c0_59] : memref<4x4xf32, #tpu.memory_space<smem>>
    %143 = vector.broadcast %142 : f32 to vector<1x16xf32>
    %144 = arith.mulf %143, %19 : vector<1x16xf32>
    %c0_60 = arith.constant 0 : index
    %c1_61 = arith.constant 1 : index
    %145 = memref.load %arg8[%c0_60, %c1_61] : memref<4x4xf32, #tpu.memory_space<smem>>
    %146 = vector.broadcast %145 : f32 to vector<1x16xf32>
    %147 = arith.mulf %146, %22 : vector<1x16xf32>
    %148 = arith.addf %144, %147 : vector<1x16xf32>
    %c0_62 = arith.constant 0 : index
    %c2_63 = arith.constant 2 : index
    %149 = memref.load %arg8[%c0_62, %c2_63] : memref<4x4xf32, #tpu.memory_space<smem>>
    %150 = vector.broadcast %149 : f32 to vector<1x16xf32>
    %151 = arith.mulf %150, %25 : vector<1x16xf32>
    %152 = arith.addf %148, %151 : vector<1x16xf32>
    %c0_64 = arith.constant 0 : index
    %c3_65 = arith.constant 3 : index
    %153 = memref.load %arg8[%c0_64, %c3_65] : memref<4x4xf32, #tpu.memory_space<smem>>
    %154 = vector.broadcast %153 : f32 to vector<1x16xf32>
    %155 = arith.mulf %154, %28 : vector<1x16xf32>
    %156 = arith.addf %152, %155 : vector<1x16xf32>
    %cst_66 = arith.constant 5.000000e-01 : f32
    %157 = vector.broadcast %cst_66 : f32 to vector<1x16xf32>
    %158 = arith.mulf %157, %19 : vector<1x16xf32>
    %159 = arith.mulf %158, %156 : vector<1x16xf32>
    %160 = arith.addf %141, %159 : vector<1x16xf32>
    %c1_67 = arith.constant 1 : index
    %c0_68 = arith.constant 0 : index
    %161 = memref.load %arg8[%c1_67, %c0_68] : memref<4x4xf32, #tpu.memory_space<smem>>
    %162 = vector.broadcast %161 : f32 to vector<1x16xf32>
    %163 = arith.mulf %162, %19 : vector<1x16xf32>
    %c1_69 = arith.constant 1 : index
    %c1_70 = arith.constant 1 : index
    %164 = memref.load %arg8[%c1_69, %c1_70] : memref<4x4xf32, #tpu.memory_space<smem>>
    %165 = vector.broadcast %164 : f32 to vector<1x16xf32>
    %166 = arith.mulf %165, %22 : vector<1x16xf32>
    %167 = arith.addf %163, %166 : vector<1x16xf32>
    %c1_71 = arith.constant 1 : index
    %c2_72 = arith.constant 2 : index
    %168 = memref.load %arg8[%c1_71, %c2_72] : memref<4x4xf32, #tpu.memory_space<smem>>
    %169 = vector.broadcast %168 : f32 to vector<1x16xf32>
    %170 = arith.mulf %169, %25 : vector<1x16xf32>
    %171 = arith.addf %167, %170 : vector<1x16xf32>
    %c1_73 = arith.constant 1 : index
    %c3_74 = arith.constant 3 : index
    %172 = memref.load %arg8[%c1_73, %c3_74] : memref<4x4xf32, #tpu.memory_space<smem>>
    %173 = vector.broadcast %172 : f32 to vector<1x16xf32>
    %174 = arith.mulf %173, %28 : vector<1x16xf32>
    %175 = arith.addf %171, %174 : vector<1x16xf32>
    %cst_75 = arith.constant 5.000000e-01 : f32
    %176 = vector.broadcast %cst_75 : f32 to vector<1x16xf32>
    %177 = arith.mulf %176, %22 : vector<1x16xf32>
    %178 = arith.mulf %177, %175 : vector<1x16xf32>
    %179 = arith.addf %160, %178 : vector<1x16xf32>
    %c2_76 = arith.constant 2 : index
    %c0_77 = arith.constant 0 : index
    %180 = memref.load %arg8[%c2_76, %c0_77] : memref<4x4xf32, #tpu.memory_space<smem>>
    %181 = vector.broadcast %180 : f32 to vector<1x16xf32>
    %182 = arith.mulf %181, %19 : vector<1x16xf32>
    %c2_78 = arith.constant 2 : index
    %c1_79 = arith.constant 1 : index
    %183 = memref.load %arg8[%c2_78, %c1_79] : memref<4x4xf32, #tpu.memory_space<smem>>
    %184 = vector.broadcast %183 : f32 to vector<1x16xf32>
    %185 = arith.mulf %184, %22 : vector<1x16xf32>
    %186 = arith.addf %182, %185 : vector<1x16xf32>
    %c2_80 = arith.constant 2 : index
    %c2_81 = arith.constant 2 : index
    %187 = memref.load %arg8[%c2_80, %c2_81] : memref<4x4xf32, #tpu.memory_space<smem>>
    %188 = vector.broadcast %187 : f32 to vector<1x16xf32>
    %189 = arith.mulf %188, %25 : vector<1x16xf32>
    %190 = arith.addf %186, %189 : vector<1x16xf32>
    %c2_82 = arith.constant 2 : index
    %c3_83 = arith.constant 3 : index
    %191 = memref.load %arg8[%c2_82, %c3_83] : memref<4x4xf32, #tpu.memory_space<smem>>
    %192 = vector.broadcast %191 : f32 to vector<1x16xf32>
    %193 = arith.mulf %192, %28 : vector<1x16xf32>
    %194 = arith.addf %190, %193 : vector<1x16xf32>
    %cst_84 = arith.constant 5.000000e-01 : f32
    %195 = vector.broadcast %cst_84 : f32 to vector<1x16xf32>
    %196 = arith.mulf %195, %25 : vector<1x16xf32>
    %197 = arith.mulf %196, %194 : vector<1x16xf32>
    %198 = arith.addf %179, %197 : vector<1x16xf32>
    %c3_85 = arith.constant 3 : index
    %c0_86 = arith.constant 0 : index
    %199 = memref.load %arg8[%c3_85, %c0_86] : memref<4x4xf32, #tpu.memory_space<smem>>
    %200 = vector.broadcast %199 : f32 to vector<1x16xf32>
    %201 = arith.mulf %200, %19 : vector<1x16xf32>
    %c3_87 = arith.constant 3 : index
    %c1_88 = arith.constant 1 : index
    %202 = memref.load %arg8[%c3_87, %c1_88] : memref<4x4xf32, #tpu.memory_space<smem>>
    %203 = vector.broadcast %202 : f32 to vector<1x16xf32>
    %204 = arith.mulf %203, %22 : vector<1x16xf32>
    %205 = arith.addf %201, %204 : vector<1x16xf32>
    %c3_89 = arith.constant 3 : index
    %c2_90 = arith.constant 2 : index
    %206 = memref.load %arg8[%c3_89, %c2_90] : memref<4x4xf32, #tpu.memory_space<smem>>
    %207 = vector.broadcast %206 : f32 to vector<1x16xf32>
    %208 = arith.mulf %207, %25 : vector<1x16xf32>
    %209 = arith.addf %205, %208 : vector<1x16xf32>
    %c3_91 = arith.constant 3 : index
    %c3_92 = arith.constant 3 : index
    %210 = memref.load %arg8[%c3_91, %c3_92] : memref<4x4xf32, #tpu.memory_space<smem>>
    %211 = vector.broadcast %210 : f32 to vector<1x16xf32>
    %212 = arith.mulf %211, %28 : vector<1x16xf32>
    %213 = arith.addf %209, %212 : vector<1x16xf32>
    %cst_93 = arith.constant 5.000000e-01 : f32
    %214 = vector.broadcast %cst_93 : f32 to vector<1x16xf32>
    %215 = arith.mulf %214, %28 : vector<1x16xf32>
    %216 = arith.mulf %215, %213 : vector<1x16xf32>
    %217 = arith.addf %198, %216 : vector<1x16xf32>
    %c0_94 = arith.constant 0 : index
    %c0_95 = arith.constant 0 : index
    %218 = memref.load %arg9[%c0_94, %c0_95] : memref<2x2xf32, #tpu.memory_space<smem>>
    %219 = vector.broadcast %218 : f32 to vector<1x16xf32>
    %220 = arith.mulf %219, %15 : vector<1x16xf32>
    %c0_96 = arith.constant 0 : index
    %c1_97 = arith.constant 1 : index
    %221 = memref.load %arg9[%c0_96, %c1_97] : memref<2x2xf32, #tpu.memory_space<smem>>
    %222 = vector.broadcast %221 : f32 to vector<1x16xf32>
    %223 = arith.mulf %222, %16 : vector<1x16xf32>
    %224 = arith.addf %220, %223 : vector<1x16xf32>
    %cst_98 = arith.constant 5.000000e-01 : f32
    %225 = vector.broadcast %cst_98 : f32 to vector<1x16xf32>
    %226 = arith.mulf %225, %15 : vector<1x16xf32>
    %227 = arith.mulf %226, %224 : vector<1x16xf32>
    %228 = arith.addf %217, %227 : vector<1x16xf32>
    %c1_99 = arith.constant 1 : index
    %c0_100 = arith.constant 0 : index
    %229 = memref.load %arg9[%c1_99, %c0_100] : memref<2x2xf32, #tpu.memory_space<smem>>
    %230 = vector.broadcast %229 : f32 to vector<1x16xf32>
    %231 = arith.mulf %230, %15 : vector<1x16xf32>
    %c1_101 = arith.constant 1 : index
    %c1_102 = arith.constant 1 : index
    %232 = memref.load %arg9[%c1_101, %c1_102] : memref<2x2xf32, #tpu.memory_space<smem>>
    %233 = vector.broadcast %232 : f32 to vector<1x16xf32>
    %234 = arith.mulf %233, %16 : vector<1x16xf32>
    %235 = arith.addf %231, %234 : vector<1x16xf32>
    %cst_103 = arith.constant 5.000000e-01 : f32
    %236 = vector.broadcast %cst_103 : f32 to vector<1x16xf32>
    %237 = arith.mulf %236, %16 : vector<1x16xf32>
    %238 = arith.mulf %237, %235 : vector<1x16xf32>
    %239 = arith.addf %228, %238 : vector<1x16xf32>
    %240 = vector.extract_strided_slice %239 {offsets = [0, 0], sizes = [1, 2], strides = [1, 1]} : vector<1x16xf32> to vector<1x2xf32>
    %241 = vector.extract_strided_slice %239 {offsets = [0, 2], sizes = [1, 2], strides = [1, 1]} : vector<1x16xf32> to vector<1x2xf32>
    %242 = arith.addf %240, %241 : vector<1x2xf32>
    %243 = vector.extract_strided_slice %239 {offsets = [0, 4], sizes = [1, 2], strides = [1, 1]} : vector<1x16xf32> to vector<1x2xf32>
    %244 = arith.addf %242, %243 : vector<1x2xf32>
    %245 = vector.extract_strided_slice %239 {offsets = [0, 6], sizes = [1, 2], strides = [1, 1]} : vector<1x16xf32> to vector<1x2xf32>
    %246 = arith.addf %244, %245 : vector<1x2xf32>
    %247 = vector.extract_strided_slice %239 {offsets = [0, 8], sizes = [1, 2], strides = [1, 1]} : vector<1x16xf32> to vector<1x2xf32>
    %248 = arith.addf %246, %247 : vector<1x2xf32>
    %249 = vector.extract_strided_slice %239 {offsets = [0, 10], sizes = [1, 2], strides = [1, 1]} : vector<1x16xf32> to vector<1x2xf32>
    %250 = arith.addf %248, %249 : vector<1x2xf32>
    %251 = vector.extract_strided_slice %239 {offsets = [0, 12], sizes = [1, 2], strides = [1, 1]} : vector<1x16xf32> to vector<1x2xf32>
    %252 = arith.addf %250, %251 : vector<1x2xf32>
    %253 = vector.extract_strided_slice %239 {offsets = [0, 14], sizes = [1, 2], strides = [1, 1]} : vector<1x16xf32> to vector<1x2xf32>
    %254 = arith.addf %252, %253 : vector<1x2xf32>
    %255 = vector.extract_strided_slice %0 {offsets = [0, 16], sizes = [1, 2], strides = [1, 1]} : vector<4x18xf32> to vector<1x2xf32>
    %256 = vector.extract_strided_slice %0 {offsets = [1, 16], sizes = [1, 2], strides = [1, 1]} : vector<4x18xf32> to vector<1x2xf32>
    %257 = vector.extract_strided_slice %0 {offsets = [2, 16], sizes = [1, 2], strides = [1, 1]} : vector<4x18xf32> to vector<1x2xf32>
    %258 = vector.extract_strided_slice %0 {offsets = [3, 16], sizes = [1, 2], strides = [1, 1]} : vector<4x18xf32> to vector<1x2xf32>
    %259 = vector.extract_strided_slice %0 {offsets = [0, 0], sizes = [1, 2], strides = [1, 1]} : vector<4x18xf32> to vector<1x2xf32>
    %260 = vector.extract_strided_slice %0 {offsets = [1, 0], sizes = [1, 2], strides = [1, 1]} : vector<4x18xf32> to vector<1x2xf32>
    %261 = vector.extract_strided_slice %0 {offsets = [2, 0], sizes = [1, 2], strides = [1, 1]} : vector<4x18xf32> to vector<1x2xf32>
    %262 = vector.extract_strided_slice %0 {offsets = [3, 0], sizes = [1, 2], strides = [1, 1]} : vector<4x18xf32> to vector<1x2xf32>
    %263 = vector.extract_strided_slice %2 {offsets = [0, 0], sizes = [1, 2], strides = [1, 1]} : vector<4x18xf32> to vector<1x2xf32>
    %264 = vector.extract_strided_slice %2 {offsets = [1, 0], sizes = [1, 2], strides = [1, 1]} : vector<4x18xf32> to vector<1x2xf32>
    %265 = vector.extract_strided_slice %2 {offsets = [2, 0], sizes = [1, 2], strides = [1, 1]} : vector<4x18xf32> to vector<1x2xf32>
    %266 = vector.extract_strided_slice %2 {offsets = [3, 0], sizes = [1, 2], strides = [1, 1]} : vector<4x18xf32> to vector<1x2xf32>
    %c0_104 = arith.constant 0 : index
    %267 = memref.load %arg11[%c0_104] : memref<4xf32, #tpu.memory_space<smem>>
    %268 = vector.broadcast %267 : f32 to vector<1x2xf32>
    %269 = arith.subf %255, %268 : vector<1x2xf32>
    %c1_105 = arith.constant 1 : index
    %270 = memref.load %arg11[%c1_105] : memref<4xf32, #tpu.memory_space<smem>>
    %271 = vector.broadcast %270 : f32 to vector<1x2xf32>
    %272 = arith.subf %256, %271 : vector<1x2xf32>
    %c2_106 = arith.constant 2 : index
    %273 = memref.load %arg11[%c2_106] : memref<4xf32, #tpu.memory_space<smem>>
    %274 = vector.broadcast %273 : f32 to vector<1x2xf32>
    %275 = arith.subf %257, %274 : vector<1x2xf32>
    %c3_107 = arith.constant 3 : index
    %276 = memref.load %arg11[%c3_107] : memref<4xf32, #tpu.memory_space<smem>>
    %277 = vector.broadcast %276 : f32 to vector<1x2xf32>
    %278 = arith.subf %258, %277 : vector<1x2xf32>
    %c0_108 = arith.constant 0 : index
    %c0_109 = arith.constant 0 : index
    %279 = memref.load %arg10[%c0_108, %c0_109] : memref<4x4xf32, #tpu.memory_space<smem>>
    %280 = vector.broadcast %279 : f32 to vector<1x2xf32>
    %281 = arith.mulf %280, %269 : vector<1x2xf32>
    %c0_110 = arith.constant 0 : index
    %c1_111 = arith.constant 1 : index
    %282 = memref.load %arg10[%c0_110, %c1_111] : memref<4x4xf32, #tpu.memory_space<smem>>
    %283 = vector.broadcast %282 : f32 to vector<1x2xf32>
    %284 = arith.mulf %283, %272 : vector<1x2xf32>
    %285 = arith.addf %281, %284 : vector<1x2xf32>
    %c0_112 = arith.constant 0 : index
    %c2_113 = arith.constant 2 : index
    %286 = memref.load %arg10[%c0_112, %c2_113] : memref<4x4xf32, #tpu.memory_space<smem>>
    %287 = vector.broadcast %286 : f32 to vector<1x2xf32>
    %288 = arith.mulf %287, %275 : vector<1x2xf32>
    %289 = arith.addf %285, %288 : vector<1x2xf32>
    %c0_114 = arith.constant 0 : index
    %c3_115 = arith.constant 3 : index
    %290 = memref.load %arg10[%c0_114, %c3_115] : memref<4x4xf32, #tpu.memory_space<smem>>
    %291 = vector.broadcast %290 : f32 to vector<1x2xf32>
    %292 = arith.mulf %291, %278 : vector<1x2xf32>
    %293 = arith.addf %289, %292 : vector<1x2xf32>
    %cst_116 = arith.constant 5.000000e-01 : f32
    %294 = vector.broadcast %cst_116 : f32 to vector<1x2xf32>
    %295 = arith.mulf %294, %269 : vector<1x2xf32>
    %296 = arith.mulf %295, %293 : vector<1x2xf32>
    %297 = arith.addf %254, %296 : vector<1x2xf32>
    %c0_117 = arith.constant 0 : index
    %c0_118 = arith.constant 0 : index
    %298 = vector.load %arg3[%c0_117, %c0_118] : memref<4x2xf32, #tpu.memory_space<vmem>>, vector<1x2xf32>
    %299 = arith.subf %259, %298 : vector<1x2xf32>
    %300 = arith.mulf %263, %299 : vector<1x2xf32>
    %301 = arith.addf %297, %300 : vector<1x2xf32>
    %c1_119 = arith.constant 1 : index
    %c0_120 = arith.constant 0 : index
    %302 = memref.load %arg10[%c1_119, %c0_120] : memref<4x4xf32, #tpu.memory_space<smem>>
    %303 = vector.broadcast %302 : f32 to vector<1x2xf32>
    %304 = arith.mulf %303, %269 : vector<1x2xf32>
    %c1_121 = arith.constant 1 : index
    %c1_122 = arith.constant 1 : index
    %305 = memref.load %arg10[%c1_121, %c1_122] : memref<4x4xf32, #tpu.memory_space<smem>>
    %306 = vector.broadcast %305 : f32 to vector<1x2xf32>
    %307 = arith.mulf %306, %272 : vector<1x2xf32>
    %308 = arith.addf %304, %307 : vector<1x2xf32>
    %c1_123 = arith.constant 1 : index
    %c2_124 = arith.constant 2 : index
    %309 = memref.load %arg10[%c1_123, %c2_124] : memref<4x4xf32, #tpu.memory_space<smem>>
    %310 = vector.broadcast %309 : f32 to vector<1x2xf32>
    %311 = arith.mulf %310, %275 : vector<1x2xf32>
    %312 = arith.addf %308, %311 : vector<1x2xf32>
    %c1_125 = arith.constant 1 : index
    %c3_126 = arith.constant 3 : index
    %313 = memref.load %arg10[%c1_125, %c3_126] : memref<4x4xf32, #tpu.memory_space<smem>>
    %314 = vector.broadcast %313 : f32 to vector<1x2xf32>
    %315 = arith.mulf %314, %278 : vector<1x2xf32>
    %316 = arith.addf %312, %315 : vector<1x2xf32>
    %cst_127 = arith.constant 5.000000e-01 : f32
    %317 = vector.broadcast %cst_127 : f32 to vector<1x2xf32>
    %318 = arith.mulf %317, %272 : vector<1x2xf32>
    %319 = arith.mulf %318, %316 : vector<1x2xf32>
    %320 = arith.addf %301, %319 : vector<1x2xf32>
    %c1_128 = arith.constant 1 : index
    %c0_129 = arith.constant 0 : index
    %321 = vector.load %arg3[%c1_128, %c0_129] : memref<4x2xf32, #tpu.memory_space<vmem>>, vector<1x2xf32>
    %322 = arith.subf %260, %321 : vector<1x2xf32>
    %323 = arith.mulf %264, %322 : vector<1x2xf32>
    %324 = arith.addf %320, %323 : vector<1x2xf32>
    %c2_130 = arith.constant 2 : index
    %c0_131 = arith.constant 0 : index
    %325 = memref.load %arg10[%c2_130, %c0_131] : memref<4x4xf32, #tpu.memory_space<smem>>
    %326 = vector.broadcast %325 : f32 to vector<1x2xf32>
    %327 = arith.mulf %326, %269 : vector<1x2xf32>
    %c2_132 = arith.constant 2 : index
    %c1_133 = arith.constant 1 : index
    %328 = memref.load %arg10[%c2_132, %c1_133] : memref<4x4xf32, #tpu.memory_space<smem>>
    %329 = vector.broadcast %328 : f32 to vector<1x2xf32>
    %330 = arith.mulf %329, %272 : vector<1x2xf32>
    %331 = arith.addf %327, %330 : vector<1x2xf32>
    %c2_134 = arith.constant 2 : index
    %c2_135 = arith.constant 2 : index
    %332 = memref.load %arg10[%c2_134, %c2_135] : memref<4x4xf32, #tpu.memory_space<smem>>
    %333 = vector.broadcast %332 : f32 to vector<1x2xf32>
    %334 = arith.mulf %333, %275 : vector<1x2xf32>
    %335 = arith.addf %331, %334 : vector<1x2xf32>
    %c2_136 = arith.constant 2 : index
    %c3_137 = arith.constant 3 : index
    %336 = memref.load %arg10[%c2_136, %c3_137] : memref<4x4xf32, #tpu.memory_space<smem>>
    %337 = vector.broadcast %336 : f32 to vector<1x2xf32>
    %338 = arith.mulf %337, %278 : vector<1x2xf32>
    %339 = arith.addf %335, %338 : vector<1x2xf32>
    %cst_138 = arith.constant 5.000000e-01 : f32
    %340 = vector.broadcast %cst_138 : f32 to vector<1x2xf32>
    %341 = arith.mulf %340, %275 : vector<1x2xf32>
    %342 = arith.mulf %341, %339 : vector<1x2xf32>
    %343 = arith.addf %324, %342 : vector<1x2xf32>
    %c2_139 = arith.constant 2 : index
    %c0_140 = arith.constant 0 : index
    %344 = vector.load %arg3[%c2_139, %c0_140] : memref<4x2xf32, #tpu.memory_space<vmem>>, vector<1x2xf32>
    %345 = arith.subf %261, %344 : vector<1x2xf32>
    %346 = arith.mulf %265, %345 : vector<1x2xf32>
    %347 = arith.addf %343, %346 : vector<1x2xf32>
    %c3_141 = arith.constant 3 : index
    %c0_142 = arith.constant 0 : index
    %348 = memref.load %arg10[%c3_141, %c0_142] : memref<4x4xf32, #tpu.memory_space<smem>>
    %349 = vector.broadcast %348 : f32 to vector<1x2xf32>
    %350 = arith.mulf %349, %269 : vector<1x2xf32>
    %c3_143 = arith.constant 3 : index
    %c1_144 = arith.constant 1 : index
    %351 = memref.load %arg10[%c3_143, %c1_144] : memref<4x4xf32, #tpu.memory_space<smem>>
    %352 = vector.broadcast %351 : f32 to vector<1x2xf32>
    %353 = arith.mulf %352, %272 : vector<1x2xf32>
    %354 = arith.addf %350, %353 : vector<1x2xf32>
    %c3_145 = arith.constant 3 : index
    %c2_146 = arith.constant 2 : index
    %355 = memref.load %arg10[%c3_145, %c2_146] : memref<4x4xf32, #tpu.memory_space<smem>>
    %356 = vector.broadcast %355 : f32 to vector<1x2xf32>
    %357 = arith.mulf %356, %275 : vector<1x2xf32>
    %358 = arith.addf %354, %357 : vector<1x2xf32>
    %c3_147 = arith.constant 3 : index
    %c3_148 = arith.constant 3 : index
    %359 = memref.load %arg10[%c3_147, %c3_148] : memref<4x4xf32, #tpu.memory_space<smem>>
    %360 = vector.broadcast %359 : f32 to vector<1x2xf32>
    %361 = arith.mulf %360, %278 : vector<1x2xf32>
    %362 = arith.addf %358, %361 : vector<1x2xf32>
    %cst_149 = arith.constant 5.000000e-01 : f32
    %363 = vector.broadcast %cst_149 : f32 to vector<1x2xf32>
    %364 = arith.mulf %363, %278 : vector<1x2xf32>
    %365 = arith.mulf %364, %362 : vector<1x2xf32>
    %366 = arith.addf %347, %365 : vector<1x2xf32>
    %c3_150 = arith.constant 3 : index
    %c0_151 = arith.constant 0 : index
    %367 = vector.load %arg3[%c3_150, %c0_151] : memref<4x2xf32, #tpu.memory_space<vmem>>, vector<1x2xf32>
    %368 = arith.subf %262, %367 : vector<1x2xf32>
    %369 = arith.mulf %266, %368 : vector<1x2xf32>
    %370 = arith.addf %366, %369 : vector<1x2xf32>
    %c0_152 = arith.constant 0 : index
    %c0_153 = arith.constant 0 : index
    %371 = vector.load %arg5[%c0_152, %c0_153] : memref<2x2xf32, #tpu.memory_space<vmem>>, vector<1x2xf32>
    %372 = vector.extract_strided_slice %1 {offsets = [0, 0], sizes = [1, 2], strides = [1, 1]} : vector<2x16xf32> to vector<1x2xf32>
    %c0_154 = arith.constant 0 : index
    %c0_155 = arith.constant 0 : index
    %373 = vector.load %arg4[%c0_154, %c0_155] : memref<2x2xf32, #tpu.memory_space<vmem>>, vector<1x2xf32>
    %374 = arith.subf %372, %373 : vector<1x2xf32>
    %375 = arith.mulf %371, %374 : vector<1x2xf32>
    %376 = arith.addf %370, %375 : vector<1x2xf32>
    %c1_156 = arith.constant 1 : index
    %c0_157 = arith.constant 0 : index
    %377 = vector.load %arg5[%c1_156, %c0_157] : memref<2x2xf32, #tpu.memory_space<vmem>>, vector<1x2xf32>
    %378 = vector.extract_strided_slice %1 {offsets = [1, 0], sizes = [1, 2], strides = [1, 1]} : vector<2x16xf32> to vector<1x2xf32>
    %c1_158 = arith.constant 1 : index
    %c0_159 = arith.constant 0 : index
    %379 = vector.load %arg4[%c1_158, %c0_159] : memref<2x2xf32, #tpu.memory_space<vmem>>, vector<1x2xf32>
    %380 = arith.subf %378, %379 : vector<1x2xf32>
    %381 = arith.mulf %377, %380 : vector<1x2xf32>
    %382 = arith.addf %376, %381 : vector<1x2xf32>
    %c0_160 = arith.constant 0 : index
    %c0_161 = arith.constant 0 : index
    %383 = vector.load %arg12[%c0_160, %c0_161] : memref<1x2xf32, #tpu.memory_space<vmem>>, vector<1x2xf32>
    tpu.vector_store %arg12[%c0_160, %c0_161], %382 {strides = array<i32>} : memref<1x2xf32, #tpu.memory_space<vmem>>, vector<1x2xf32>,
    return
  }
}

</mosaic_0001>

<llo_original>
// kernel: _ocp_forward_impl.1
$region0: #{_ocp_forward_impl.1}
  #allocation0 [shape = 'u32[]', space=smem, size = 0x4, offset = 0x4, fixed_abs, tag = 'smem constant byte address 0x4 - core index']
  #allocation1 [shape = 'u32[144,128]{1,0:T(1,128)}', space=vmem, size = 0x12000, scoped, tag = 'internal scratch']
  %s0 = inlined_call_operand.vmem [shape: f32[4,18], index: 0, kind: input, shape index: {}]
  %s1 = inlined_call_operand.vmem [shape: f32[2,16], index: 1, kind: input, shape index: {}]
  %s2 = inlined_call_operand.vmem [shape: f32[4,18], index: 2, kind: input, shape index: {}]
  %s3 = inlined_call_operand.vmem [shape: f32[4,2], index: 3, kind: input, shape index: {}]
  %s4 = inlined_call_operand.vmem [shape: f32[2,2], index: 4, kind: input, shape index: {}]
  %s5 = inlined_call_operand.vmem [shape: f32[2,2], index: 5, kind: input, shape index: {}]
  %s6 = inlined_call_operand.vmem [shape: f32[4,4], index: 6, kind: input, shape index: {}]
  %s7 = inlined_call_operand.vmem [shape: f32[4,2], index: 7, kind: input, shape index: {}]
  %s8 = inlined_call_operand.vmem [shape: f32[4,4], index: 8, kind: input, shape index: {}]
  %s9 = inlined_call_operand.vmem [shape: f32[2,2], index: 9, kind: input, shape index: {}]
  %s10 = inlined_call_operand.vmem [shape: f32[4,4], index: 10, kind: input, shape index: {}]
  %s11 = inlined_call_operand.vmem [shape: f32[4], index: 11, kind: input, shape index: {}]
  %s12 = inlined_call_operand.hbm [shape: f32[1,2], index: 12, kind: output, shape index: {}]
  %s13 = sld [smem:[#allocation0]]
  $region82: #{_ocp_forward_impl.1} parent=0
    _
  %s15 = ssub.s32 1, %s13
  %s16 = scalar_select 0, %s15, %s13
  $region1: #{_ocp_forward_impl.1} parent=0
    #allocation2 [shape = 'u8[2048]{0}', space=smem, size = 0x800, scoped, tag = 'input window, operand 6, single buffered']
    #allocation3 [shape = 's32[1]{0}', space=sflag, size = 0x4, scoped, tag = 'scoped memory for _ocp_forward_impl.1']
    #allocation4 [shape = 's32[1]{0}', space=sflag, size = 0x4, scoped, tag = 'scoped memory for _ocp_forward_impl.1']
    #allocation5 [shape = 'u8[2048]{0}', space=smem, size = 0x800, scoped, tag = 'input window, operand 7, single buffered']
    #allocation6 [shape = 's32[1]{0}', space=sflag, size = 0x4, scoped, tag = 'scoped memory for _ocp_forward_impl.1']
    #allocation7 [shape = 'u8[2048]{0}', space=smem, size = 0x800, scoped, tag = 'input window, operand 8, single buffered']
    #allocation8 [shape = 'u8[1024]{0}', space=smem, size = 0x400, scoped, tag = 'input window, operand 9, single buffered']
    #allocation9 [shape = 's32[1]{0}', space=sflag, size = 0x4, scoped, tag = 'scoped memory for _ocp_forward_impl.1']
    #allocation10 [shape = 'u8[2048]{0}', space=smem, size = 0x800, scoped, tag = 'input window, operand 10, single buffered']
    #allocation11 [shape = 'u8[512]{0}', space=smem, size = 0x200, scoped, tag = 'input window, operand 11, single buffered']
    #allocation12 [shape = 's32[1]{0}', space=sflag, size = 0x4, scoped, tag = 'scoped memory for _ocp_forward_impl.1']
    #allocation13 [shape = 'u8[512]{0}', space=vmem, size = 0x400, scoped, tag = 'output window, operand 0, single buffered']
    %17 = vsyncpa [#allocation4], 0
    %18 = vsyncpa [#allocation6], 0
    %19 = vsyncpa [#allocation9], 0
    %20 = vsyncpa [#allocation12], 0
    %21 = vsyncpa [#allocation3], 0
    // Predicated region
    $region2: #{_ocp_forward_impl.1} parent=1 // pred_check
      _
    $region3: #{_ocp_forward_impl.1} parent=1 // pred_check_branch
      %23 = sbr.rel (0) target = $region5
    $region4: #{_ocp_forward_impl.1} parent=1 // pred_region
      _
    $region5: #{_ocp_forward_impl.1} parent=1 // pred_fallthru
      _
    // Predicated region
    $region6: #{_ocp_forward_impl.1} parent=1 // pred_check
      _
    $region7: #{_ocp_forward_impl.1} parent=1 // pred_check_branch
      %25 = sbr.rel (0) target = $region9
    $region8: #{_ocp_forward_impl.1} parent=1 // pred_region
      _
    $region9: #{_ocp_forward_impl.1} parent=1 // pred_fallthru
      _
    // Predicated region
    $region10: #{_ocp_forward_impl.1} parent=1 // pred_check
      _
    $region11: #{_ocp_forward_impl.1} parent=1 // pred_check_branch
      %27 = sbr.rel (0) target = $region13
    $region12: #{_ocp_forward_impl.1} parent=1 // pred_region
      _
    $region13: #{_ocp_forward_impl.1} parent=1 // pred_fallthru
      _
    // Predicated region
    $region14: #{_ocp_forward_impl.1} parent=1 // pred_check
      _
    $region15: #{_ocp_forward_impl.1} parent=1 // pred_check_branch
      %29 = sbr.rel (0) target = $region17
    $region16: #{_ocp_forward_impl.1} parent=1 // pred_region
      _
    $region17: #{_ocp_forward_impl.1} parent=1 // pred_fallthru
      _
    // Predicated region
    $region18: #{_ocp_forward_impl.1} parent=1 // pred_check
      _
    $region19: #{_ocp_forward_impl.1} parent=1 // pred_check_branch
      %31 = sbr.rel (0) target = $region21
    $region20: #{_ocp_forward_impl.1} parent=1 // pred_region
      _
    $region21: #{_ocp_forward_impl.1} parent=1 // pred_fallthru
      _
    // Predicated region
    $region22: #{_ocp_forward_impl.1} parent=1 // pred_check
      _
    $region23: #{_ocp_forward_impl.1} parent=1 // pred_check_branch
      %33 = sbr.rel (0) target = $region25
    $region24: #{_ocp_forward_impl.1} parent=1 // pred_region
      _
    $region25: #{_ocp_forward_impl.1} parent=1 // pred_fallthru
      _
    // Predicated region
    $region26: #{_ocp_forward_impl.1} parent=1 // pred_check
      _
    $region27: #{_ocp_forward_impl.1} parent=1 // pred_check_branch
      %35 = sbr.rel (0) target = $region29
    $region28: #{_ocp_forward_impl.1} parent=1 // pred_region
      %s37 = ssub.s32 64, 64
      %38 = vsyncadd [#allocation4], %s37
      %s40 = sshll.u32 %s6, 4
      %s41 = int_to_ptr.vmem [resolvable:$true] %s40
      %43 = dma.vmem_to_smem %s41, 64, [#allocation2], [#allocation4]
    $region29: #{_ocp_forward_impl.1} parent=1 // pred_fallthru
      _
    // Predicated region
    $region30: #{_ocp_forward_impl.1} parent=1 // pred_check
      _
    $region31: #{_ocp_forward_impl.1} parent=1 // pred_check_branch
      %45 = sbr.rel (0) target = $region33
    $region32: #{_ocp_forward_impl.1} parent=1 // pred_region
      %s47 = ssub.s32 64, 64
      %48 = vsyncadd [#allocation6], %s47
      %s50 = sshll.u32 %s7, 4
      %s51 = int_to_ptr.vmem [resolvable:$true] %s50
      %53 = dma.vmem_to_smem %s51, 64, [#allocation5], [#allocation6]
    $region33: #{_ocp_forward_impl.1} parent=1 // pred_fallthru
      _
    // Predicated region
    $region34: #{_ocp_forward_impl.1} parent=1 // pred_check
      _
    $region35: #{_ocp_forward_impl.1} parent=1 // pred_check_branch
      %55 = sbr.rel (0) target = $region37
    $region36: #{_ocp_forward_impl.1} parent=1 // pred_region
      %s57 = ssub.s32 64, 64
      %58 = vsyncadd [#allocation6], %s57
      %s60 = sshll.u32 %s8, 4
      %s61 = int_to_ptr.vmem [resolvable:$true] %s60
      %63 = dma.vmem_to_smem %s61, 64, [#allocation7], [#allocation6]
    $region37: #{_ocp_forward_impl.1} parent=1 // pred_fallthru
      _
    // Predicated region
    $region38: #{_ocp_forward_impl.1} parent=1 // pred_check
      _
    $region39: #{_ocp_forward_impl.1} parent=1 // pred_check_branch
      %65 = sbr.rel (0) target = $region41
    $region40: #{_ocp_forward_impl.1} parent=1 // pred_region
      %s67 = ssub.s32 32, 32
      %68 = vsyncadd [#allocation9], %s67
      %s70 = sshll.u32 %s9, 4
      %s71 = int_to_ptr.vmem [resolvable:$true] %s70
      %73 = dma.vmem_to_smem %s71, 32, [#allocation8], [#allocation9]
    $region41: #{_ocp_forward_impl.1} parent=1 // pred_fallthru
      _
    // Predicated region
    $region42: #{_ocp_forward_impl.1} parent=1 // pred_check
      _
    $region43: #{_ocp_forward_impl.1} parent=1 // pred_check_branch
      %75 = sbr.rel (0) target = $region45
    $region44: #{_ocp_forward_impl.1} parent=1 // pred_region
      %s77 = ssub.s32 64, 64
      %78 = vsyncadd [#allocation9], %s77
      %s80 = sshll.u32 %s10, 4
      %s81 = int_to_ptr.vmem [resolvable:$true] %s80
      %83 = dma.vmem_to_smem %s81, 64, [#allocation10], [#allocation9]
    $region45: #{_ocp_forward_impl.1} parent=1 // pred_fallthru
      _
    // Predicated region
    $region46: #{_ocp_forward_impl.1} parent=1 // pred_check
      _
    $region47: #{_ocp_forward_impl.1} parent=1 // pred_check_branch
      %85 = sbr.rel (0) target = $region49
    $region48: #{_ocp_forward_impl.1} parent=1 // pred_region
      %s87 = ssub.s32 16, 16
      %88 = vsyncadd [#allocation12], %s87
      %s90 = sshll.u32 %s11, 4
      %s91 = int_to_ptr.vmem [resolvable:$true] %s90
      %93 = dma.vmem_to_smem %s91, 16, [#allocation11], [#allocation12]
    $region49: #{_ocp_forward_impl.1} parent=1 // pred_fallthru
      _
    // Predicated region
    $region50: #{_ocp_forward_impl.1} parent=1 // pred_check
      _
    $region51: #{_ocp_forward_impl.1} parent=1 // pred_check_branch
      %95 = sbr.rel (0) target = $region53
    $region52: #{_ocp_forward_impl.1} parent=1 // pred_region
      %96 = dma.done [#allocation4], 64
    $region53: #{_ocp_forward_impl.1} parent=1 // pred_fallthru
      _
    // Predicated region
    $region54: #{_ocp_forward_impl.1} parent=1 // pred_check
      _
    $region55: #{_ocp_forward_impl.1} parent=1 // pred_check_branch
      %98 = sbr.rel (0) target = $region57
    $region56: #{_ocp_forward_impl.1} parent=1 // pred_region
      %99 = dma.done [#allocation6], 64
    $region57: #{_ocp_forward_impl.1} parent=1 // pred_fallthru
      _
    // Predicated region
    $region58: #{_ocp_forward_impl.1} parent=1 // pred_check
      _
    $region59: #{_ocp_forward_impl.1} parent=1 // pred_check_branch
      %101 = sbr.rel (0) target = $region61
    $region60: #{_ocp_forward_impl.1} parent=1 // pred_region
      %102 = dma.done [#allocation6], 64
    $region61: #{_ocp_forward_impl.1} parent=1 // pred_fallthru
      _
    // Predicated region
    $region62: #{_ocp_forward_impl.1} parent=1 // pred_check
      _
    $region63: #{_ocp_forward_impl.1} parent=1 // pred_check_branch
      %104 = sbr.rel (0) target = $region65
    $region64: #{_ocp_forward_impl.1} parent=1 // pred_region
      %105 = dma.done [#allocation9], 32
    $region65: #{_ocp_forward_impl.1} parent=1 // pred_fallthru
      _
    // Predicated region
    $region66: #{_ocp_forward_impl.1} parent=1 // pred_check
      _
    $region67: #{_ocp_forward_impl.1} parent=1 // pred_check_branch
      %107 = sbr.rel (0) target = $region69
    $region68: #{_ocp_forward_impl.1} parent=1 // pred_region
      %108 = dma.done [#allocation9], 64
    $region69: #{_ocp_forward_impl.1} parent=1 // pred_fallthru
      _
    // Predicated region
    $region70: #{_ocp_forward_impl.1} parent=1 // pred_check
      _
    $region71: #{_ocp_forward_impl.1} parent=1 // pred_check_branch
      %110 = sbr.rel (0) target = $region73
    $region72: #{_ocp_forward_impl.1} parent=1 // pred_region
      %111 = dma.done [#allocation12], 16
    $region73: #{_ocp_forward_impl.1} parent=1 // pred_fallthru
      _
    %112 = sfence
    %v113 = vld [vmem:[%s0] sm:$0xf]
    %v114 = vld [vmem:[%s1] sm:$0x3]
    %v115 = vld [vmem:[%s2] sm:$0xf]
    %s116 = sld [smem:[#allocation11]]
    %v117 = vstv %s116
    %v118 = vsub.f32 %v113, %v117
    %s119 = sld [smem:[#allocation11 + $0x1]]
    %v120 = vstv %s119
    %v121 = vsub.f32 %v113, %v120
    %s122 = sld [smem:[#allocation11 + $0x2]]
    %v123 = vstv %s122
    %v124 = vsub.f32 %v113, %v123
    %s125 = sld [smem:[#allocation11 + $0x3]]
    %v126 = vstv %s125
    %v127 = vsub.f32 %v113, %v126
    %v128 = vsub.f32 0.0, %v113
    %s129 = sld [smem:[#allocation2]]
    %v130 = vstv %s129
    %v131 = vmul.f32 %v130, %v113
    %133 = vrot.lane.b32.xlu0 %v131, 2
    %v134 = vpop.permute.xlu0 %133
    %v136 = vadd.f32 %v128, %v134
    %s137 = sld [smem:[#allocation2 + $0x1]]
    %v138 = vstv %s137
    %v139 = vmul.f32 %v138, %v113
    %v141 = vrot.slane %v139, 1
    %142 = vrot.lane.b32.xlu0 %v141, 2
    %v143 = vpop.permute.xlu0 %142
    %v145 = vadd.f32 %v136, %v143
    %s146 = sld [smem:[#allocation2 + $0x2]]
    %v147 = vstv %s146
    %v148 = vmul.f32 %v147, %v113
    %v150 = vrot.slane %v148, 2
    %151 = vrot.lane.b32.xlu0 %v150, 2
    %v152 = vpop.permute.xlu0 %151
    %v154 = vadd.f32 %v145, %v152
    %s155 = sld [smem:[#allocation2 + $0x3]]
    %v156 = vstv %s155
    %v157 = vmul.f32 %v156, %v113
    %v159 = vrot.slane %v157, 3
    %160 = vrot.lane.b32.xlu0 %v159, 2
    %v161 = vpop.permute.xlu0 %160
    %v163 = vadd.f32 %v154, %v161
    %s164 = sld [smem:[#allocation5]]
    %v165 = vstv %s164
    %v166 = vmul.f32 %v165, %v114
    %168 = vrot.lane.b32.xlu0 %v166, 2
    %v169 = vpop.permute.xlu0 %168
    %v171 = vadd.f32 %v163, %v169
    %s172 = sld [smem:[#allocation5 + $0x1]]
    %v173 = vstv %s172
    %v174 = vmul.f32 %v173, %v114
    %v176 = vrot.slane %v174, 1
    %177 = vrot.lane.b32.xlu0 %v176, 2
    %v178 = vpop.permute.xlu0 %177
    %v180 = vadd.f32 %v171, %v178
    %v181 = vmul.f32 %v115, %v180
    %v182 = vadd.f32 %v181, 0.0
    %s183 = sld [smem:[#allocation2 + $0x80]]
    %v184 = vstv %s183
    %v185 = vmul.f32 %v184, %v113
    %v187 = vrot.slane %v185, 7
    %188 = vrot.lane.b32.xlu0 %v187, 2
    %v189 = vpop.permute.xlu0 %188
    %v191 = vadd.f32 %v128, %v189
    %s192 = sld [smem:[#allocation2 + $0x81]]
    %v193 = vstv %s192
    %v194 = vmul.f32 %v193, %v113
    %196 = vrot.lane.b32.xlu0 %v194, 2
    %v197 = vpop.permute.xlu0 %196
    %v199 = vadd.f32 %v191, %v197
    %s200 = sld [smem:[#allocation2 + $0x82]]
    %v201 = vstv %s200
    %v202 = vmul.f32 %v201, %v113
    %v204 = vrot.slane %v202, 1
    %205 = vrot.lane.b32.xlu0 %v204, 2
    %v206 = vpop.permute.xlu0 %205
    %v208 = vadd.f32 %v199, %v206
    %s209 = sld [smem:[#allocation2 + $0x83]]
    %v210 = vstv %s209
    %v211 = vmul.f32 %v210, %v113
    %v213 = vrot.slane %v211, 2
    %214 = vrot.lane.b32.xlu0 %v213, 2
    %v215 = vpop.permute.xlu0 %214
    %v217 = vadd.f32 %v208, %v215
    %s218 = sld [smem:[#allocation5 + $0x80]]
    %v219 = vstv %s218
    %v220 = vmul.f32 %v219, %v114
    %v222 = vrot.slane %v220, 7
    %223 = vrot.lane.b32.xlu0 %v222, 2
    %v224 = vpop.permute.xlu0 %223
    %v226 = vadd.f32 %v217, %v224
    %s227 = sld [smem:[#allocation5 + $0x81]]
    %v228 = vstv %s227
    %v229 = vmul.f32 %v228, %v114
    %231 = vrot.lane.b32.xlu0 %v229, 2
    %v232 = vpop.permute.xlu0 %231
    %v234 = vadd.f32 %v226, %v232
    %v235 = vmul.f32 %v115, %v234
    %v237 = vrot.slane %v235, 1
    %v239 = vadd.f32 %v182, %v237
    %s240 = sld [smem:[#allocation2 + $0x100]]
    %v241 = vstv %s240
    %v242 = vmul.f32 %v241, %v113
    %v244 = vrot.slane %v242, 6
    %245 = vrot.lane.b32.xlu0 %v244, 2
    %v246 = vpop.permute.xlu0 %245
    %v248 = vadd.f32 %v128, %v246
    %s249 = sld [smem:[#allocation2 + $0x101]]
    %v250 = vstv %s249
    %v251 = vmul.f32 %v250, %v113
    %v253 = vrot.slane %v251, 7
    %254 = vrot.lane.b32.xlu0 %v253, 2
    %v255 = vpop.permute.xlu0 %254
    %v257 = vadd.f32 %v248, %v255
    %s258 = sld [smem:[#allocation2 + $0x102]]
    %v259 = vstv %s258
    %v260 = vmul.f32 %v259, %v113
    %262 = vrot.lane.b32.xlu0 %v260, 2
    %v263 = vpop.permute.xlu0 %262
    %v265 = vadd.f32 %v257, %v263
    %s266 = sld [smem:[#allocation2 + $0x103]]
    %v267 = vstv %s266
    %v268 = vmul.f32 %v267, %v113
    %v270 = vrot.slane %v268, 1
    %271 = vrot.lane.b32.xlu0 %v270, 2
    %v272 = vpop.permute.xlu0 %271
    %v274 = vadd.f32 %v265, %v272
    %s275 = sld [smem:[#allocation5 + $0x100]]
    %v276 = vstv %s275
    %v277 = vmul.f32 %v276, %v114
    %v279 = vrot.slane %v277, 6
    %280 = vrot.lane.b32.xlu0 %v279, 2
    %v281 = vpop.permute.xlu0 %280
    %v283 = vadd.f32 %v274, %v281
    %s284 = sld [smem:[#allocation5 + $0x101]]
    %v285 = vstv %s284
    %v286 = vmul.f32 %v285, %v114
    %v288 = vrot.slane %v286, 7
    %289 = vrot.lane.b32.xlu0 %v288, 2
    %v290 = vpop.permute.xlu0 %289
    %v292 = vadd.f32 %v283, %v290
    %v293 = vmul.f32 %v115, %v292
    %v295 = vrot.slane %v293, 2
    %v297 = vadd.f32 %v239, %v295
    %s298 = sld [smem:[#allocation2 + $0x180]]
    %v299 = vstv %s298
    %v300 = vmul.f32 %v299, %v113
    %v302 = vrot.slane %v300, 5
    %303 = vrot.lane.b32.xlu0 %v302, 2
    %v304 = vpop.permute.xlu0 %303
    %v306 = vadd.f32 %v128, %v304
    %s307 = sld [smem:[#allocation2 + $0x181]]
    %v308 = vstv %s307
    %v309 = vmul.f32 %v308, %v113
    %v311 = vrot.slane %v309, 6
    %312 = vrot.lane.b32.xlu0 %v311, 2
    %v313 = vpop.permute.xlu0 %312
    %v315 = vadd.f32 %v306, %v313
    %s316 = sld [smem:[#allocation2 + $0x182]]
    %v317 = vstv %s316
    %v318 = vmul.f32 %v317, %v113
    %v320 = vrot.slane %v318, 7
    %321 = vrot.lane.b32.xlu0 %v320, 2
    %v322 = vpop.permute.xlu0 %321
    %v324 = vadd.f32 %v315, %v322
    %s325 = sld [smem:[#allocation2 + $0x183]]
    %v326 = vstv %s325
    %v327 = vmul.f32 %v326, %v113
    %329 = vrot.lane.b32.xlu0 %v327, 2
    %v330 = vpop.permute.xlu0 %329
    %v332 = vadd.f32 %v324, %v330
    %s333 = sld [smem:[#allocation5 + $0x180]]
    %v334 = vstv %s333
    %v335 = vmul.f32 %v334, %v114
    %v337 = vrot.slane %v335, 5
    %338 = vrot.lane.b32.xlu0 %v337, 2
    %v339 = vpop.permute.xlu0 %338
    %v341 = vadd.f32 %v332, %v339
    %s342 = sld [smem:[#allocation5 + $0x181]]
    %v343 = vstv %s342
    %v344 = vmul.f32 %v343, %v114
    %v346 = vrot.slane %v344, 6
    %347 = vrot.lane.b32.xlu0 %v346, 2
    %v348 = vpop.permute.xlu0 %347
    %v350 = vadd.f32 %v341, %v348
    %v351 = vmul.f32 %v115, %v350
    %v353 = vrot.slane %v351, 3
    %v355 = vadd.f32 %v297, %v353
    %s356 = sld [smem:[#allocation7]]
    %v357 = vstv %s356
    %v358 = vmul.f32 %v357, %v118
    %s359 = sld [smem:[#allocation7 + $0x1]]
    %v360 = vstv %s359
    %v361 = vmul.f32 %v360, %v121
    %v363 = vrot.slane %v361, 1
    %v365 = vadd.f32 %v358, %v363
    %s366 = sld [smem:[#allocation7 + $0x2]]
    %v367 = vstv %s366
    %v368 = vmul.f32 %v367, %v124
    %v370 = vrot.slane %v368, 2
    %v372 = vadd.f32 %v365, %v370
    %s373 = sld [smem:[#allocation7 + $0x3]]
    %v374 = vstv %s373
    %v375 = vmul.f32 %v374, %v127
    %v377 = vrot.slane %v375, 3
    %v379 = vadd.f32 %v372, %v377
    %v380 = vmul.f32 %v118, 0.5
    %v381 = vmul.f32 %v380, %v379
    %383 = vrot.lane.b32.xlu0 %v381, 2
    %v384 = vpop.permute.xlu0 %383
    %v386 = vadd.f32 %v355, %v384
    %s387 = sld [smem:[#allocation7 + $0x80]]
    %v388 = vstv %s387
    %v389 = vmul.f32 %v388, %v118
    %s390 = sld [smem:[#allocation7 + $0x81]]
    %v391 = vstv %s390
    %v392 = vmul.f32 %v391, %v121
    %v394 = vrot.slane %v392, 1
    %v396 = vadd.f32 %v389, %v394
    %s397 = sld [smem:[#allocation7 + $0x82]]
    %v398 = vstv %s397
    %v399 = vmul.f32 %v398, %v124
    %v401 = vrot.slane %v399, 2
    %v403 = vadd.f32 %v396, %v401
    %s404 = sld [smem:[#allocation7 + $0x83]]
    %v405 = vstv %s404
    %v406 = vmul.f32 %v405, %v127
    %v408 = vrot.slane %v406, 3
    %v410 = vadd.f32 %v403, %v408
    %v411 = vmul.f32 %v121, 0.5
    %v413 = vrot.slane %v410, 7
    %v415 = vmul.f32 %v411, %v413
    %v417 = vrot.slane %v415, 1
    %418 = vrot.lane.b32.xlu0 %v417, 2
    %v419 = vpop.permute.xlu0 %418
    %v421 = vadd.f32 %v386, %v419
    %s422 = sld [smem:[#allocation7 + $0x100]]
    %v423 = vstv %s422
    %v424 = vmul.f32 %v423, %v118
    %s425 = sld [smem:[#allocation7 + $0x101]]
    %v426 = vstv %s425
    %v427 = vmul.f32 %v426, %v121
    %v429 = vrot.slane %v427, 1
    %v431 = vadd.f32 %v424, %v429
    %s432 = sld [smem:[#allocation7 + $0x102]]
    %v433 = vstv %s432
    %v434 = vmul.f32 %v433, %v124
    %v436 = vrot.slane %v434, 2
    %v438 = vadd.f32 %v431, %v436
    %s439 = sld [smem:[#allocation7 + $0x103]]
    %v440 = vstv %s439
    %v441 = vmul.f32 %v440, %v127
    %v443 = vrot.slane %v441, 3
    %v445 = vadd.f32 %v438, %v443
    %v446 = vmul.f32 %v124, 0.5
    %v448 = vrot.slane %v445, 6
    %v450 = vmul.f32 %v446, %v448
    %v452 = vrot.slane %v450, 2
    %453 = vrot.lane.b32.xlu0 %v452, 2
    %v454 = vpop.permute.xlu0 %453
    %v456 = vadd.f32 %v421, %v454
    %s457 = sld [smem:[#allocation7 + $0x180]]
    %v458 = vstv %s457
    %v459 = vmul.f32 %v458, %v118
    %s460 = sld [smem:[#allocation7 + $0x181]]
    %v461 = vstv %s460
    %v462 = vmul.f32 %v461, %v121
    %v464 = vrot.slane %v462, 1
    %v466 = vadd.f32 %v459, %v464
    %s467 = sld [smem:[#allocation7 + $0x182]]
    %v468 = vstv %s467
    %v469 = vmul.f32 %v468, %v124
    %v471 = vrot.slane %v469, 2
    %v473 = vadd.f32 %v466, %v471
    %s474 = sld [smem:[#allocation7 + $0x183]]
    %v475 = vstv %s474
    %v476 = vmul.f32 %v475, %v127
    %v478 = vrot.slane %v476, 3
    %v480 = vadd.f32 %v473, %v478
    %v481 = vmul.f32 %v127, 0.5
    %v483 = vrot.slane %v480, 5
    %v485 = vmul.f32 %v481, %v483
    %v487 = vrot.slane %v485, 3
    %488 = vrot.lane.b32.xlu0 %v487, 2
    %v489 = vpop.permute.xlu0 %488
    %v491 = vadd.f32 %v456, %v489
    %s492 = sld [smem:[#allocation8]]
    %v493 = vstv %s492
    %v494 = vmul.f32 %v493, %v114
    %s495 = sld [smem:[#allocation8 + $0x1]]
    %v496 = vstv %s495
    %v497 = vmul.f32 %v496, %v114
    %v499 = vrot.slane %v497, 1
    %v501 = vadd.f32 %v494, %v499
    %v502 = vmul.f32 %v114, 0.5
    %v503 = vmul.f32 %v502, %v501
    %505 = vrot.lane.b32.xlu0 %v503, 2
    %v506 = vpop.permute.xlu0 %505
    %v508 = vadd.f32 %v491, %v506
    %s509 = sld [smem:[#allocation8 + $0x80]]
    %v510 = vstv %s509
    %v511 = vmul.f32 %v510, %v114
    %s512 = sld [smem:[#allocation8 + $0x81]]
    %v513 = vstv %s512
    %v514 = vmul.f32 %v513, %v114
    %v516 = vrot.slane %v514, 1
    %v518 = vadd.f32 %v511, %v516
    %v520 = vrot.slane %v518, 7
    %v522 = vmul.f32 %v502, %v520
    %v524 = vrot.slane %v522, 1
    %525 = vrot.lane.b32.xlu0 %v524, 2
    %v526 = vpop.permute.xlu0 %525
    %v528 = vadd.f32 %v508, %v526
    %530 = vrot.lane.b32.xlu0 %v528, 126
    %v531 = vpop.permute.xlu0 %530
    %v533 = vadd.f32 %v528, %v531
    %534 = vrot.lane.b32.xlu0 %v528, 124
    %v535 = vpop.permute.xlu0 %534
    %v537 = vadd.f32 %v533, %v535
    %538 = vrot.lane.b32.xlu0 %v528, 122
    %v539 = vpop.permute.xlu0 %538
    %v541 = vadd.f32 %v537, %v539
    %542 = vrot.lane.b32.xlu0 %v528, 120
    %v543 = vpop.permute.xlu0 %542
    %v545 = vadd.f32 %v541, %v543
    %546 = vrot.lane.b32.xlu0 %v528, 118
    %v547 = vpop.permute.xlu0 %546
    %v549 = vadd.f32 %v545, %v547
    %550 = vrot.lane.b32.xlu0 %v528, 116
    %v551 = vpop.permute.xlu0 %550
    %v553 = vadd.f32 %v549, %v551
    %554 = vrot.lane.b32.xlu0 %v528, 114
    %v555 = vpop.permute.xlu0 %554
    %v557 = vadd.f32 %v553, %v555
    %s558 = sld [smem:[#allocation10]]
    %v559 = vstv %s558
    %v560 = vmul.f32 %v559, %v118
    %s561 = sld [smem:[#allocation10 + $0x1]]
    %v562 = vstv %s561
    %v563 = vmul.f32 %v562, %v121
    %v565 = vrot.slane %v563, 1
    %v567 = vadd.f32 %v560, %v565
    %s568 = sld [smem:[#allocation10 + $0x2]]
    %v569 = vstv %s568
    %v570 = vmul.f32 %v569, %v124
    %v572 = vrot.slane %v570, 2
    %v574 = vadd.f32 %v567, %v572
    %s575 = sld [smem:[#allocation10 + $0x3]]
    %v576 = vstv %s575
    %v577 = vmul.f32 %v576, %v127
    %v579 = vrot.slane %v577, 3
    %v581 = vadd.f32 %v574, %v579
    %v582 = vmul.f32 %v380, %v581
    %584 = vrot.lane.b32.xlu0 %v582, 114
    %v585 = vpop.permute.xlu0 %584
    %v587 = vadd.f32 %v557, %v585
    %v588 = vld [vmem:[%s3] sm:$0x1]
    %v589 = vsub.f32 %v113, %v588
    %v590 = vmul.f32 %v115, %v589
    %592 = vrot.lane.b32.xlu0 %v590, 2
    %v593 = vpop.permute.xlu0 %592
    %v595 = vadd.f32 %v587, %v593
    %s596 = sld [smem:[#allocation10 + $0x80]]
    %v597 = vstv %s596
    %v598 = vmul.f32 %v597, %v118
    %s599 = sld [smem:[#allocation10 + $0x81]]
    %v600 = vstv %s599
    %v601 = vmul.f32 %v600, %v121
    %v603 = vrot.slane %v601, 1
    %v605 = vadd.f32 %v598, %v603
    %s606 = sld [smem:[#allocation10 + $0x82]]
    %v607 = vstv %s606
    %v608 = vmul.f32 %v607, %v124
    %v610 = vrot.slane %v608, 2
    %v612 = vadd.f32 %v605, %v610
    %s613 = sld [smem:[#allocation10 + $0x83]]
    %v614 = vstv %s613
    %v615 = vmul.f32 %v614, %v127
    %v617 = vrot.slane %v615, 3
    %v619 = vadd.f32 %v612, %v617
    %v621 = vrot.slane %v619, 7
    %v623 = vmul.f32 %v411, %v621
    %v625 = vrot.slane %v623, 1
    %626 = vrot.lane.b32.xlu0 %v625, 114
    %v627 = vpop.permute.xlu0 %626
    %v629 = vadd.f32 %v595, %v627
    %v630 = vld [vmem:[%s3 + $0x1] sm:$0x1]
    %v632 = vrot.slane %v630, 7
    %v634 = vsub.f32 %v113, %v632
    %v635 = vmul.f32 %v115, %v634
    %v637 = vrot.slane %v635, 1
    %638 = vrot.lane.b32.xlu0 %v637, 2
    %v639 = vpop.permute.xlu0 %638
    %v641 = vadd.f32 %v629, %v639
    %s642 = sld [smem:[#allocation10 + $0x100]]
    %v643 = vstv %s642
    %v644 = vmul.f32 %v643, %v118
    %s645 = sld [smem:[#allocation10 + $0x101]]
    %v646 = vstv %s645
    %v647 = vmul.f32 %v646, %v121
    %v649 = vrot.slane %v647, 1
    %v651 = vadd.f32 %v644, %v649
    %s652 = sld [smem:[#allocation10 + $0x102]]
    %v653 = vstv %s652
    %v654 = vmul.f32 %v653, %v124
    %v656 = vrot.slane %v654, 2
    %v658 = vadd.f32 %v651, %v656
    %s659 = sld [smem:[#allocation10 + $0x103]]
    %v660 = vstv %s659
    %v661 = vmul.f32 %v660, %v127
    %v663 = vrot.slane %v661, 3
    %v665 = vadd.f32 %v658, %v663
    %v667 = vrot.slane %v665, 6
    %v669 = vmul.f32 %v446, %v667
    %v671 = vrot.slane %v669, 2
    %672 = vrot.lane.b32.xlu0 %v671, 114
    %v673 = vpop.permute.xlu0 %672
    %v675 = vadd.f32 %v641, %v673
    %v676 = vld [vmem:[%s3 + $0x2] sm:$0x1]
    %v678 = vrot.slane %v676, 6
    %v680 = vsub.f32 %v113, %v678
    %v681 = vmul.f32 %v115, %v680
    %v683 = vrot.slane %v681, 2
    %684 = vrot.lane.b32.xlu0 %v683, 2
    %v685 = vpop.permute.xlu0 %684
    %v687 = vadd.f32 %v675, %v685
    %s688 = sld [smem:[#allocation10 + $0x180]]
    %v689 = vstv %s688
    %v690 = vmul.f32 %v689, %v118
    %s691 = sld [smem:[#allocation10 + $0x181]]
    %v692 = vstv %s691
    %v693 = vmul.f32 %v692, %v121
    %v695 = vrot.slane %v693, 1
    %v697 = vadd.f32 %v690, %v695
    %s698 = sld [smem:[#allocation10 + $0x182]]
    %v699 = vstv %s698
    %v700 = vmul.f32 %v699, %v124
    %v702 = vrot.slane %v700, 2
    %v704 = vadd.f32 %v697, %v702
    %s705 = sld [smem:[#allocation10 + $0x183]]
    %v706 = vstv %s705
    %v707 = vmul.f32 %v706, %v127
    %v709 = vrot.slane %v707, 3
    %v711 = vadd.f32 %v704, %v709
    %v713 = vrot.slane %v711, 5
    %v715 = vmul.f32 %v481, %v713
    %v717 = vrot.slane %v715, 3
    %718 = vrot.lane.b32.xlu0 %v717, 114
    %v719 = vpop.permute.xlu0 %718
    %v721 = vadd.f32 %v687, %v719
    %v722 = vld [vmem:[%s3 + $0x3] sm:$0x1]
    %v724 = vrot.slane %v722, 5
    %v726 = vsub.f32 %v113, %v724
    %v727 = vmul.f32 %v115, %v726
    %v729 = vrot.slane %v727, 3
    %730 = vrot.lane.b32.xlu0 %v729, 2
    %v731 = vpop.permute.xlu0 %730
    %v733 = vadd.f32 %v721, %v731
    %v734 = vld [vmem:[%s5] sm:$0x1]
    %v735 = vld [vmem:[%s4] sm:$0x1]
    %v736 = vsub.f32 %v114, %v735
    %v737 = vmul.f32 %v734, %v736
    %739 = vrot.lane.b32.xlu0 %v737, 2
    %v740 = vpop.permute.xlu0 %739
    %v742 = vadd.f32 %v733, %v740
    %v743 = vld [vmem:[%s5 + $0x1] sm:$0x1]
    %v744 = vld [vmem:[%s4 + $0x1] sm:$0x1]
    %v746 = vrot.slane %v744, 7
    %v748 = vsub.f32 %v114, %v746
    %v750 = vrot.slane %v748, 1
    %v752 = vmul.f32 %v743, %v750
    %754 = vrot.lane.b32.xlu0 %v752, 2
    %v755 = vpop.permute.xlu0 %754
    %v757 = vadd.f32 %v742, %v755
    %759 = vrot.lane.b32.xlu0 %v757, 126
    %v760 = vpop.permute.xlu0 %759
    %vm762 = vcmask 8192
    %763 = vst.msk [vmem:[#allocation13] sm:$0x1] %vm762, %v760
    // Predicated region
    $region74: #{_ocp_forward_impl.1} parent=1 // pred_check
      _
    $region75: #{_ocp_forward_impl.1} parent=1 // pred_check_branch
      %765 = sbr.rel (0) target = $region77
    $region76: #{_ocp_forward_impl.1} parent=1 // pred_region
      %s767 = ssub.s32 16, 16
      %768 = vsyncadd [#allocation3], %s767
      %s770 = sshll.u32 [#allocation13], 4
      %s771 = int_to_ptr.vmem [resolvable:$true] %s770
      %773 = dma.vmem_to_hbm [thread:$0]  %s771, 16, %s12, [#allocation3]
    $region77: #{_ocp_forward_impl.1} parent=1 // pred_fallthru
      _
    // Predicated region
    $region78: #{_ocp_forward_impl.1} parent=1 // pred_check
      _
    $region79: #{_ocp_forward_impl.1} parent=1 // pred_check_branch
      %775 = sbr.rel (0) target = $region81
    $region80: #{_ocp_forward_impl.1} parent=1 // pred_region
      %776 = dma.done [#allocation3], 16
    $region81: #{_ocp_forward_impl.1} parent=1 // pred_fallthru
      _
    %777 = vsyncpa [#allocation3], 1
    %778 = vsyncpa [#allocation4], 1
    %779 = vsyncpa [#allocation6], 1
    %780 = vsyncpa [#allocation9], 1
    %781 = vsyncpa [#allocation12], 1

</llo_original>
